<compile_context>
chip_gen: v7x
topology: tpu7x:2x2x1
jax: 0.10.0
libtpu: 0.0.40
codegen_flags: <defaults>
</compile_context>

<pallas_src>
import jax
import jax.numpy as jnp
from jax.experimental import pallas as pl
from jax.experimental.pallas import tpu as pltpu

KSIZE = 7
PAD = 3


# ---------------------------------------------------------------------------
# Weight-side "im2col": re-express the 2-in/1-out KxK "same" conv as a dense
# matmul operand.  Built once per conv weight, reused for every forward call.
# ---------------------------------------------------------------------------
def _conv_as_matmul_weight(conv_weight, H, W):
    """(1, 2, K, K) conv weight -> M of shape (2, H*W, H*W) with
       out_flat[p] = sum_q avg_flat[q]*M[0,q,p] + max_flat[q]*M[1,q,p]."""
    _, in_ch, K, _ = conv_weight.shape
    pad = K // 2
    HW = H * W
    w = conv_weight.reshape(in_ch, K, K).astype(jnp.float32)

    qi = jnp.arange(H)[:, None]
    pi = jnp.arange(H)[None, :]
    qj = jnp.arange(W)[:, None]
    pj = jnp.arange(W)[None, :]
    di = qi - pi + pad                                    # (H, H) kernel-row index
    dj = qj - pj + pad                                    # (W, W) kernel-col index
    valid = (((di >= 0) & (di < K))[:, :, None, None]
             & ((dj >= 0) & (dj < K))[None, None, :, :])  # (H, H, W, W)
    di_c = jnp.clip(di, 0, K - 1)
    dj_c = jnp.clip(dj, 0, K - 1)
    # m[ch, qi, pi, qj, pj] = w[ch, di, dj], zeroed outside the kernel support.
    m = w[:, di_c[:, :, None, None], dj_c[None, None, :, :]]   # (2, H, H, W, W)
    m = jnp.where(valid[None], m, 0.0)
    m = m.transpose(0, 1, 3, 2, 4).reshape(in_ch, HW, HW)      # (ch, q, p)
    return m


def build_spatial_conv_operand(conv_weight, H, W, C, dtype=jnp.bfloat16):
    """Precompute the (2*HW, HW) bf16 matmul operand.

    Rows [0, HW) multiply the channel-SUM plane (1/C of the mean folded in),
    rows [HW, 2*HW) multiply the channel-MAX plane.  Build once per weight
    update; the per-call kernel just consumes it.
    """
    HW = H * W
    m = _conv_as_matmul_weight(conv_weight, H, W)               # (2, HW, HW) f32
    scale = jnp.array([1.0 / C, 1.0], jnp.float32)[:, None, None]
    return (m * scale).reshape(2 * HW, HW).astype(dtype)


# ---------------------------------------------------------------------------
# Kernel
# ---------------------------------------------------------------------------
def _spatial_attention_kernel(x_ref, w_ref, o_ref):
    # x_ref: (nb, C, HW)   batch tile, spatial plane flattened onto the lanes
    # w_ref: (2*HW, HW)    bf16 conv-as-matmul operand (constant block index)
    # o_ref: (nb, HW)      sublane/lane dense output tile
    x = x_ref[...]                       # loaded once; both reductions reuse it
    ssum = jnp.sum(x, axis=1, dtype=jnp.float32)                # (nb, HW) f32
    mx = jnp.max(x, axis=1)                                     # (nb, HW)
    # bf16 MXU operands, f32 accumulate; single fused dot with K = 2*HW.
    pooled = jnp.concatenate(
        [ssum.astype(jnp.bfloat16), mx.astype(jnp.bfloat16)], axis=-1)
    y = jnp.dot(pooled, w_ref[...], preferred_element_type=jnp.float32)
    o_ref[...] = jax.nn.sigmoid(y).astype(o_ref.dtype)


# ---------------------------------------------------------------------------
# Generation-aware tiling policy
# ---------------------------------------------------------------------------
def _chip_info():
    """(vmem_capacity_bytes, tensorcores_per_chip), with safe fallbacks."""
    kind = ""
    try:
        kind = str(jax.devices()[0].device_kind).lower()
    except Exception:
        pass
    is_v7 = ("v7" in kind) or ("7x" in kind.replace(" ", ""))
    num_tc = 2 if is_v7 else 1
    vmem_cap = (64 << 20) if is_v7 else (128 << 20)
    try:
        vmem_cap = int(pltpu.get_tpu_info().vmem_capacity_bytes)
    except Exception:
        pass
    return vmem_cap, num_tc


def _pick_batch_block(N, C, HW, itemsize, num_tc, x_budget_bytes):
    """Per-step batch tile nb (a divisor of N).

    v5e/v6e (1 TC): the grid is a serial loop, so take the largest tile that
    fits the x budget (fewer ~0.35us steps, bigger MXU M).  v7x (2 TCs): keep
    >= 2 grid steps when possible so both cores get work.  Tiles are kept
    sublane friendly: a multiple of 8, or the full batch.
    """
    aligned = [d for d in range(1, N + 1)
               if N % d == 0 and (d % 8 == 0 or d == N)]
    fitting = [d for d in aligned
               if 2 * d * C * HW * itemsize <= x_budget_bytes]
    cands = fitting if fitting else [min(aligned)]
    if num_tc >= 2:
        split = [d for d in cands if N // d >= num_tc]
        if split:
            cands = split
    return max(cands)


# ---------------------------------------------------------------------------
# Wrapper
# ---------------------------------------------------------------------------
def spatial_attention(x, w_operand):
    """x: [N, C, H, W]; w_operand: (2*H*W, H*W) from build_spatial_conv_operand.

    Returns sigmoid(conv2d(cat([mean_c(x), max_c(x)], 1), W_7x7, pad=3)) with
    shape [N, 1, H, W].
    """
    N, C, H, W = x.shape
    HW = H * W
    assert w_operand.shape == (2 * HW, HW)
    itemsize = jnp.dtype(x.dtype).itemsize

    vmem_cap, num_tc = _chip_info()
    x_budget = min(32 << 20, vmem_cap // 4)
    nb = _pick_batch_block(N, C, HW, itemsize, num_tc, x_budget)
    grid = (N // nb,)

    # VMEM limit from the actual (double-buffered) block sizes + headroom,
    # clamped to chip capacity.  (The constant-index weight block would be
    # single-bufferable via pl.Buffered(1); counted twice here to be safe.)
    w_bytes = 2 * HW * HW * jnp.dtype(w_operand.dtype).itemsize
    x_block_bytes = nb * C * HW * itemsize
    o_block_bytes = nb * HW * itemsize
    vmem_limit = int(min(
        vmem_cap,
        2 * (x_block_bytes + w_bytes + o_block_bytes) + (8 << 20)))

    x3 = x.reshape(N, C, HW)        # lane-dense: H*W on the 128-lane axis

    out2 = pl.pallas_call(
        _spatial_attention_kernel,
        out_shape=jax.ShapeDtypeStruct((N, HW), x.dtype),
        grid=grid,
        in_specs=[
            pl.BlockSpec((nb, C, HW), lambda b: (b, 0, 0)),     # x batch tile
            pl.BlockSpec((2 * HW, HW), lambda b: (0, 0)),       # constant weight block
        ],
        out_specs=pl.BlockSpec((nb, HW), lambda b: (b, 0)),
        compiler_params=pltpu.CompilerParams(
            dimension_semantics=("parallel",),
            vmem_limit_bytes=vmem_limit,
        ),
    )(x3, w_operand)

    return out2.reshape(N, 1, H, W)


# ---------------------------------------------------------------------------
# Pure-JAX reference (matches the PyTorch module)
# ---------------------------------------------------------------------------
def reference(x, conv_weight):
    avg = jnp.mean(x, axis=1, keepdims=True)
    mx = jnp.max(x, axis=1, keepdims=True)
    cat = jnp.concatenate([avg, mx], axis=1)
    y = jax.lax.conv_general_dilated(
        cat, conv_weight, window_strides=(1, 1),
        padding=((PAD, PAD), (PAD, PAD)),
        dimension_numbers=("NCHW", "OIHW", "NCHW"),
        precision=jax.lax.Precision.HIGHEST,
    )
    return jax.nn.sigmoid(y)


if __name__ == "__main__":
    key = jax.random.PRNGKey(0)
    kx, kw = jax.random.split(key)

    N, C, H, W = 2, 4, 16, 16
    x = jax.random.normal(kx, (N, C, H, W), dtype=jnp.float32)
    # Deterministic synthetic conv weight (matches nn.Conv2d(2, 1, 7, bias=False)).
    conv_weight = 0.1 * jax.random.normal(kw, (1, 2, KSIZE, KSIZE), dtype=jnp.float32)

    # Built once per weight (outside the per-call path), reused across calls.
    w_operand = build_spatial_conv_operand(conv_weight, H, W, C)

    out = spatial_attention(x, w_operand)
    out = jax.block_until_ready(out)

    ref = reference(x, conv_weight)
    assert out.shape == (N, 1, H, W)
    # Post-sigmoid outputs lie in (0, 1).  Genuine tap/mask/layout bugs show
    # up at > 1e-1; bf16 operand/weight quantization on the MXU (f32
    # accumulate) stays well below 5e-3 after the sigmoid compresses the range.
    err = float(jnp.max(jnp.abs(out - ref)))
    assert err < 5e-3, f"mismatch vs reference: max abs err = {err}"
    print("KERNEL_OK")
</pallas_src>

<mosaic_0001>
module attributes {stable_mosaic.version = 11 : i64} {
  func.func @_spatial_attention_kernel(%arg0: i32, %arg1: memref<2x4x256xf32, #tpu.memory_space<vmem>>, %arg2: memref<512x256xbf16, #tpu.memory_space<vmem>>, %arg3: memref<2x256xf32, #tpu.memory_space<vmem>>) attributes {dimension_semantics = [#tpu.dimension_semantics<parallel>], iteration_bounds = array<i64: 1>, scalar_prefetch = 0 : i64, scratch_operands = 0 : i64, tpu.core_type = #tpu.core_type<tc>, window_params = [{transform_indices = @transform_0, window_bounds = array<i64: 2, 4, 256>}, {pipeline_mode = #tpu.pipeline_mode<synchronous>, transform_indices = @transform_1, window_bounds = array<i64: 512, 256>}, {transform_indices = @transform_2, window_bounds = array<i64: 2, 256>}]} {
    %c0 = arith.constant 0 : index
    %c0_0 = arith.constant 0 : index
    %c0_1 = arith.constant 0 : index
    %0 = vector.load %arg1[%c0, %c0_0, %c0_1] : memref<2x4x256xf32, #tpu.memory_space<vmem>>, vector<2x4x256xf32>
    %cst = arith.constant dense<0.000000e+00> : vector<2x256xf32>
    %1 = vector.multi_reduction <add>, %0, %cst [1] : vector<2x4x256xf32> to vector<2x256xf32>
    %cst_2 = arith.constant dense<0xFF800000> : vector<2x256xf32>
    %2 = vector.multi_reduction <maximumf>, %0, %cst_2 [1] : vector<2x4x256xf32> to vector<2x256xf32>
    %3 = arith.truncf %1 : vector<2x256xf32> to vector<2x256xbf16>
    %4 = arith.truncf %2 : vector<2x256xf32> to vector<2x256xbf16>
    %5 = tpu.concatenate %3, %4 in 1 : vector<2x256xbf16>, vector<2x256xbf16> -> vector<2x512xbf16>
    %c0_3 = arith.constant 0 : index
    %c0_4 = arith.constant 0 : index
    %6 = vector.load %arg2[%c0_3, %c0_4] : memref<512x256xbf16, #tpu.memory_space<vmem>>, vector<512x256xbf16>
    %cst_5 = arith.constant dense<0.000000e+00> : vector<2x256xf32>
    %7 = tpu.matmul %5, %6, %cst_5 {dimension_numbers = #tpu.dot_dimension_numbers<[1], [0], [0], [1], [0, 0, 1, 1], [], []>} : vector<2x512xbf16>, vector<512x256xbf16>, vector<2x256xf32> -> vector<2x256xf32>
    %8 = arith.negf %7 : vector<2x256xf32>
    %9 = math.exp %8 : vector<2x256xf32>
    %cst_6 = arith.constant 1.000000e+00 : f32
    %10 = vector.broadcast %cst_6 : f32 to vector<2x256xf32>
    %11 = arith.addf %10, %9 : vector<2x256xf32>
    %12 = arith.divf %10, %11 : vector<2x256xf32>
    %c0_7 = arith.constant 0 : index
    %c0_8 = arith.constant 0 : index
    %13 = vector.load %arg3[%c0_7, %c0_8] : memref<2x256xf32, #tpu.memory_space<vmem>>, vector<2x256xf32>
    tpu.vector_store %arg3[%c0_7, %c0_8], %12 {strides = array<i32>} : memref<2x256xf32, #tpu.memory_space<vmem>>, vector<2x256xf32>,
    return
  }
  func.func @transform_0(%arg0: i32) -> (i32, i32, i32) {
    %c0_i32 = arith.constant 0 : i32
    %c0_i32_0 = arith.constant 0 : i32
    %c0_i32_1 = arith.constant 0 : i32
    return %arg0, %c0_i32, %c0_i32_0 : i32, i32, i32
  }
  func.func @transform_1(%arg0: i32) -> (i32, i32) {
    %c0_i32 = arith.constant 0 : i32
    %c0_i32_0 = arith.constant 0 : i32
    %c0_i32_1 = arith.constant 0 : i32
    return %c0_i32, %c0_i32_0 : i32, i32
  }
  func.func @transform_2(%arg0: i32) -> (i32, i32) {
    %c0_i32 = arith.constant 0 : i32
    %c0_i32_0 = arith.constant 0 : i32
    return %arg0, %c0_i32 : i32, i32
  }
}

</mosaic_0001>

<llo_original>
// kernel: tpu_custom_call.1
$region0: #{tpu_custom_call.1}
  #allocation0 [shape = 'u32[]', space=smem, size = 0x4, offset = 0x4, fixed_abs, tag = 'smem constant byte address 0x4 - core index']
  #allocation1 [shape = 'u32[144,128]{1,0:T(1,128)}', space=vmem, size = 0x12000, scoped, tag = 'internal scratch']
  %s0 = inlined_call_operand.hbm [shape: f32[2,4,256], index: 0, kind: input, shape index: {}]
  %s1 = inlined_call_operand.hbm [shape: bf16[512,256], index: 1, kind: input, shape index: {}]
  %s2 = inlined_call_operand.hbm [shape: f32[2,256], index: 2, kind: output, shape index: {}]
  %s3 = sld [smem:[#allocation0]]
  $region26: #{tpu_custom_call.1} parent=0
    _
  %s5 = ssub.s32 1, %s3
  %s6 = scalar_select 0, %s5, %s3
  $region1: #{tpu_custom_call.1} parent=0
    #allocation2 [shape = 'u8[8192]{0}', space=vmem, size = 0x2000, scoped, tag = 'input window, operand 0, single buffered']
    #allocation3 [shape = 's32[1]{0}', space=sflag, size = 0x4, scoped, tag = 'scoped memory for tpu_custom_call.1']
    #allocation4 [shape = 's32[1]{0}', space=sflag, size = 0x4, scoped, tag = 'scoped memory for tpu_custom_call.1']
    #allocation5 [shape = 'u8[262144]{0}', space=vmem, size = 0x40000, scoped, tag = 'input window, operand 1, single buffered']
    #allocation6 [shape = 's32[1]{0}', space=sflag, size = 0x4, scoped, tag = 'scoped memory for tpu_custom_call.1']
    #allocation7 [shape = 'u8[2048]{0}', space=vmem, size = 0x800, scoped, tag = 'output window, operand 0, single buffered']
    %7 = vsyncpa [#allocation3], 0
    %8 = vsyncpa [#allocation6], 0
    %9 = vsyncpa [#allocation4], 0
    // Predicated region
    $region2: #{tpu_custom_call.1} parent=1 // pred_check
      _
    $region3: #{tpu_custom_call.1} parent=1 // pred_check_branch
      %11 = sbr.rel (0) target = $region5
    $region4: #{tpu_custom_call.1} parent=1 // pred_region
      %s13 = ssub.s32 256, 256
      %14 = vsyncadd [#allocation3], %s13
      %s15 = sshll.u32 [#allocation2], 4
      %s16 = int_to_ptr.vmem [resolvable:$true] %s15
      %21 = dma.hbm_to_vmem [thread:$0]  %s0, 256, %s16, [#allocation3], 128, 128, 8
    $region5: #{tpu_custom_call.1} parent=1 // pred_fallthru
      _
    // Predicated region
    $region6: #{tpu_custom_call.1} parent=1 // pred_check
      _
    $region7: #{tpu_custom_call.1} parent=1 // pred_check_branch
      %23 = sbr.rel (0) target = $region9
    $region8: #{tpu_custom_call.1} parent=1 // pred_region
      %s25 = ssub.s32 8192, 8192
      %26 = vsyncadd [#allocation6], %s25
      %s27 = sshll.u32 [#allocation5], 4
      %s28 = int_to_ptr.vmem [resolvable:$true] %s27
      %33 = dma.hbm_to_vmem [thread:$0]  %s1, 8192, %s28, [#allocation6], 128, 128, 8
    $region9: #{tpu_custom_call.1} parent=1 // pred_fallthru
      _
    // Predicated region
    $region10: #{tpu_custom_call.1} parent=1 // pred_check
      _
    $region11: #{tpu_custom_call.1} parent=1 // pred_check_branch
      %35 = sbr.rel (0) target = $region13
    $region12: #{tpu_custom_call.1} parent=1 // pred_region
      %36 = dma.done [#allocation3], 256
    $region13: #{tpu_custom_call.1} parent=1 // pred_fallthru
      _
    // Predicated region
    $region14: #{tpu_custom_call.1} parent=1 // pred_check
      _
    $region15: #{tpu_custom_call.1} parent=1 // pred_check_branch
      %38 = sbr.rel (0) target = $region17
    $region16: #{tpu_custom_call.1} parent=1 // pred_region
      %39 = dma.done [#allocation6], 8192
    $region17: #{tpu_custom_call.1} parent=1 // pred_fallthru
      _
    %v40 = vld [vmem:[#allocation2] sm:$0xff]
    %v41 = vld [vmem:[#allocation2 + $0x8] sm:$0xff]
    %v44 = vcombine.high %v40, %v40
    %v45 = vcombine.high %v41, %v41
    %vm48 = vcmask 1043456
    %v49 = vsel %vm48, %v40, 0.0
    %v50 = vrot.slane %v49, 4
    %v51 = vadd.f32 %v49, %v50
    %v52 = vrot.slane %v51, 2
    %v53 = vadd.f32 %v51, %v52
    %v54 = vrot.slane %v53, 1
    %v55 = vadd.f32 %v53, %v54
    %v56 = vsel %vm48, %v44, 0.0
    %v57 = vrot.slane %v56, 4
    %v58 = vadd.f32 %v56, %v57
    %v59 = vrot.slane %v58, 2
    %v60 = vadd.f32 %v58, %v59
    %v61 = vrot.slane %v60, 1
    %v62 = vadd.f32 %v60, %v61
    %v63 = vsel %vm48, %v41, 0.0
    %v64 = vrot.slane %v63, 4
    %v65 = vadd.f32 %v63, %v64
    %v66 = vrot.slane %v65, 2
    %v67 = vadd.f32 %v65, %v66
    %v68 = vrot.slane %v67, 1
    %v69 = vadd.f32 %v67, %v68
    %v70 = vsel %vm48, %v45, 0.0
    %v71 = vrot.slane %v70, 4
    %v72 = vadd.f32 %v70, %v71
    %v73 = vrot.slane %v72, 2
    %v74 = vadd.f32 %v72, %v73
    %v75 = vrot.slane %v74, 1
    %v76 = vadd.f32 %v74, %v75
    %v77 = vsel %vm48, %v40, -inf
    %v78 = vrot.slane %v77, 4
    %v79 = vmax.f32 %v77, %v78
    %v80 = vrot.slane %v79, 2
    %v81 = vmax.f32 %v79, %v80
    %v82 = vrot.slane %v81, 1
    %v83 = vmax.f32 %v81, %v82
    %v84 = vsel %vm48, %v44, -inf
    %v85 = vrot.slane %v84, 4
    %v86 = vmax.f32 %v84, %v85
    %v87 = vrot.slane %v86, 2
    %v88 = vmax.f32 %v86, %v87
    %v89 = vrot.slane %v88, 1
    %v90 = vmax.f32 %v88, %v89
    %v91 = vsel %vm48, %v41, -inf
    %v92 = vrot.slane %v91, 4
    %v93 = vmax.f32 %v91, %v92
    %v94 = vrot.slane %v93, 2
    %v95 = vmax.f32 %v93, %v94
    %v96 = vrot.slane %v95, 1
    %v97 = vmax.f32 %v95, %v96
    %v98 = vsel %vm48, %v45, -inf
    %v99 = vrot.slane %v98, 4
    %v100 = vmax.f32 %v98, %v99
    %v101 = vrot.slane %v100, 2
    %v102 = vmax.f32 %v100, %v101
    %v103 = vrot.slane %v102, 1
    %v104 = vmax.f32 %v102, %v103
    %v105 = vpack.c.bf16 %v55, %v55
    %v106 = vpack.c.bf16 %v62, %v62
    %v107 = vpack.c.bf16 %v69, %v69
    %v108 = vpack.c.bf16 %v76, %v76
    %v109 = vpack.c.bf16 %v83, %v83
    %v110 = vpack.c.bf16 %v90, %v90
    %v111 = vpack.c.bf16 %v97, %v97
    %v112 = vpack.c.bf16 %v104, %v104
    %v117 = vunpack.c.l.b16 %v105
    %v118 = vunpack.c.l.b16 %v106
    %v119 = vunpack.c.l.b16 %v107
    %v120 = vunpack.c.l.b16 %v108
    %vm121 = vcmask 1041409
    %v122 = vsel %vm121, %v119, %v117
    %v123 = vsel %vm121, %v120, %v118
    %v124 = vpack.c.b16 %v122, %v122
    %v125 = vpack.c.b16 %v123, %v123
    %v132 = vunpack.c.l.b16 %v109
    %v133 = vunpack.c.l.b16 %v110
    %v134 = vunpack.c.l.b16 %v111
    %v135 = vunpack.c.l.b16 %v112
    %v136 = vsel %vm121, %v134, %v132
    %v137 = vsel %vm121, %v135, %v133
    %v138 = vpack.c.b16 %v136, %v136
    %v139 = vpack.c.b16 %v137, %v137
    %v142 = vld [vmem:[#allocation5] sm:$0xff]
    %v143 = vld [vmem:[#allocation5 + $0x8] sm:$0xff]
    %v144 = vld [vmem:[#allocation5 + $0x10] sm:$0xff]
    %v145 = vld [vmem:[#allocation5 + $0x18] sm:$0xff]
    %v146 = vld [vmem:[#allocation5 + $0x20] sm:$0xff]
    %v147 = vld [vmem:[#allocation5 + $0x28] sm:$0xff]
    %v148 = vld [vmem:[#allocation5 + $0x30] sm:$0xff]
    %v149 = vld [vmem:[#allocation5 + $0x38] sm:$0xff]
    %v150 = vld [vmem:[#allocation5 + $0x40] sm:$0xff]
    %v151 = vld [vmem:[#allocation5 + $0x48] sm:$0xff]
    %v152 = vld [vmem:[#allocation5 + $0x50] sm:$0xff]
    %v153 = vld [vmem:[#allocation5 + $0x58] sm:$0xff]
    %v154 = vld [vmem:[#allocation5 + $0x60] sm:$0xff]
    %v155 = vld [vmem:[#allocation5 + $0x68] sm:$0xff]
    %v156 = vld [vmem:[#allocation5 + $0x70] sm:$0xff]
    %v157 = vld [vmem:[#allocation5 + $0x78] sm:$0xff]
    %v158 = vld [vmem:[#allocation5 + $0x80] sm:$0xff]
    %v159 = vld [vmem:[#allocation5 + $0x88] sm:$0xff]
    %v160 = vld [vmem:[#allocation5 + $0x90] sm:$0xff]
    %v161 = vld [vmem:[#allocation5 + $0x98] sm:$0xff]
    %v162 = vld [vmem:[#allocation5 + $0xa0] sm:$0xff]
    %v163 = vld [vmem:[#allocation5 + $0xa8] sm:$0xff]
    %v164 = vld [vmem:[#allocation5 + $0xb0] sm:$0xff]
    %v165 = vld [vmem:[#allocation5 + $0xb8] sm:$0xff]
    %v166 = vld [vmem:[#allocation5 + $0xc0] sm:$0xff]
    %v167 = vld [vmem:[#allocation5 + $0xc8] sm:$0xff]
    %v168 = vld [vmem:[#allocation5 + $0xd0] sm:$0xff]
    %v169 = vld [vmem:[#allocation5 + $0xd8] sm:$0xff]
    %v170 = vld [vmem:[#allocation5 + $0xe0] sm:$0xff]
    %v171 = vld [vmem:[#allocation5 + $0xe8] sm:$0xff]
    %v172 = vld [vmem:[#allocation5 + $0xf0] sm:$0xff]
    %v173 = vld [vmem:[#allocation5 + $0xf8] sm:$0xff]
    %v174 = vld [vmem:[#allocation5 + $0x100] sm:$0xff]
    %v175 = vld [vmem:[#allocation5 + $0x108] sm:$0xff]
    %v176 = vld [vmem:[#allocation5 + $0x110] sm:$0xff]
    %v177 = vld [vmem:[#allocation5 + $0x118] sm:$0xff]
    %v178 = vld [vmem:[#allocation5 + $0x120] sm:$0xff]
    %v179 = vld [vmem:[#allocation5 + $0x128] sm:$0xff]
    %v180 = vld [vmem:[#allocation5 + $0x130] sm:$0xff]
    %v181 = vld [vmem:[#allocation5 + $0x138] sm:$0xff]
    %v182 = vld [vmem:[#allocation5 + $0x140] sm:$0xff]
    %v183 = vld [vmem:[#allocation5 + $0x148] sm:$0xff]
    %v184 = vld [vmem:[#allocation5 + $0x150] sm:$0xff]
    %v185 = vld [vmem:[#allocation5 + $0x158] sm:$0xff]
    %v186 = vld [vmem:[#allocation5 + $0x160] sm:$0xff]
    %v187 = vld [vmem:[#allocation5 + $0x168] sm:$0xff]
    %v188 = vld [vmem:[#allocation5 + $0x170] sm:$0xff]
    %v189 = vld [vmem:[#allocation5 + $0x178] sm:$0xff]
    %v190 = vld [vmem:[#allocation5 + $0x180] sm:$0xff]
    %v191 = vld [vmem:[#allocation5 + $0x188] sm:$0xff]
    %v192 = vld [vmem:[#allocation5 + $0x190] sm:$0xff]
    %v193 = vld [vmem:[#allocation5 + $0x198] sm:$0xff]
    %v194 = vld [vmem:[#allocation5 + $0x1a0] sm:$0xff]
    %v195 = vld [vmem:[#allocation5 + $0x1a8] sm:$0xff]
    %v196 = vld [vmem:[#allocation5 + $0x1b0] sm:$0xff]
    %v197 = vld [vmem:[#allocation5 + $0x1b8] sm:$0xff]
    %v198 = vld [vmem:[#allocation5 + $0x1c0] sm:$0xff]
    %v199 = vld [vmem:[#allocation5 + $0x1c8] sm:$0xff]
    %v200 = vld [vmem:[#allocation5 + $0x1d0] sm:$0xff]
    %v201 = vld [vmem:[#allocation5 + $0x1d8] sm:$0xff]
    %v202 = vld [vmem:[#allocation5 + $0x1e0] sm:$0xff]
    %v203 = vld [vmem:[#allocation5 + $0x1e8] sm:$0xff]
    %v204 = vld [vmem:[#allocation5 + $0x1f0] sm:$0xff]
    %v205 = vld [vmem:[#allocation5 + $0x1f8] sm:$0xff]
    %v270 = vunpack.c.l.b16 %v142
    %v271 = vunpack.c.h.b16 %v142
    %v272 = vunpack.c.l.b16 %v143
    %v273 = vunpack.c.h.b16 %v143
    %v274 = vunpack.c.l.b16 %v144
    %v275 = vunpack.c.h.b16 %v144
    %v276 = vunpack.c.l.b16 %v145
    %v277 = vunpack.c.h.b16 %v145
    %v278 = vunpack.c.l.b16 %v146
    %v279 = vunpack.c.h.b16 %v146
    %v280 = vunpack.c.l.b16 %v147
    %v281 = vunpack.c.h.b16 %v147
    %v282 = vunpack.c.l.b16 %v148
    %v283 = vunpack.c.h.b16 %v148
    %v284 = vunpack.c.l.b16 %v149
    %v285 = vunpack.c.h.b16 %v149
    %v286 = vunpack.c.l.b16 %v150
    %v287 = vunpack.c.h.b16 %v150
    %v288 = vunpack.c.l.b16 %v151
    %v289 = vunpack.c.h.b16 %v151
    %v290 = vunpack.c.l.b16 %v152
    %v291 = vunpack.c.h.b16 %v152
    %v292 = vunpack.c.l.b16 %v153
    %v293 = vunpack.c.h.b16 %v153
    %v294 = vunpack.c.l.b16 %v154
    %v295 = vunpack.c.h.b16 %v154
    %v296 = vunpack.c.l.b16 %v155
    %v297 = vunpack.c.h.b16 %v155
    %v298 = vunpack.c.l.b16 %v156
    %v299 = vunpack.c.h.b16 %v156
    %v300 = vunpack.c.l.b16 %v157
    %v301 = vunpack.c.h.b16 %v157
    %v302 = vunpack.c.l.b16 %v158
    %v303 = vunpack.c.h.b16 %v158
    %v304 = vunpack.c.l.b16 %v159
    %v305 = vunpack.c.h.b16 %v159
    %v306 = vunpack.c.l.b16 %v160
    %v307 = vunpack.c.h.b16 %v160
    %v308 = vunpack.c.l.b16 %v161
    %v309 = vunpack.c.h.b16 %v161
    %v310 = vunpack.c.l.b16 %v162
    %v311 = vunpack.c.h.b16 %v162
    %v312 = vunpack.c.l.b16 %v163
    %v313 = vunpack.c.h.b16 %v163
    %v314 = vunpack.c.l.b16 %v164
    %v315 = vunpack.c.h.b16 %v164
    %v316 = vunpack.c.l.b16 %v165
    %v317 = vunpack.c.h.b16 %v165
    %v318 = vunpack.c.l.b16 %v166
    %v319 = vunpack.c.h.b16 %v166
    %v320 = vunpack.c.l.b16 %v167
    %v321 = vunpack.c.h.b16 %v167
    %v322 = vunpack.c.l.b16 %v168
    %v323 = vunpack.c.h.b16 %v168
    %v324 = vunpack.c.l.b16 %v169
    %v325 = vunpack.c.h.b16 %v169
    %v326 = vunpack.c.l.b16 %v170
    %v327 = vunpack.c.h.b16 %v170
    %v328 = vunpack.c.l.b16 %v171
    %v329 = vunpack.c.h.b16 %v171
    %v330 = vunpack.c.l.b16 %v172
    %v331 = vunpack.c.h.b16 %v172
    %v332 = vunpack.c.l.b16 %v173
    %v333 = vunpack.c.h.b16 %v173
    %v334 = vunpack.c.l.b16 %v174
    %v335 = vunpack.c.h.b16 %v174
    %v336 = vunpack.c.l.b16 %v175
    %v337 = vunpack.c.h.b16 %v175
    %v338 = vunpack.c.l.b16 %v176
    %v339 = vunpack.c.h.b16 %v176
    %v340 = vunpack.c.l.b16 %v177
    %v341 = vunpack.c.h.b16 %v177
    %v342 = vunpack.c.l.b16 %v178
    %v343 = vunpack.c.h.b16 %v178
    %v344 = vunpack.c.l.b16 %v179
    %v345 = vunpack.c.h.b16 %v179
    %v346 = vunpack.c.l.b16 %v180
    %v347 = vunpack.c.h.b16 %v180
    %v348 = vunpack.c.l.b16 %v181
    %v349 = vunpack.c.h.b16 %v181
    %v350 = vunpack.c.l.b16 %v182
    %v351 = vunpack.c.h.b16 %v182
    %v352 = vunpack.c.l.b16 %v183
    %v353 = vunpack.c.h.b16 %v183
    %v354 = vunpack.c.l.b16 %v184
    %v355 = vunpack.c.h.b16 %v184
    %v356 = vunpack.c.l.b16 %v185
    %v357 = vunpack.c.h.b16 %v185
    %v358 = vunpack.c.l.b16 %v186
    %v359 = vunpack.c.h.b16 %v186
    %v360 = vunpack.c.l.b16 %v187
    %v361 = vunpack.c.h.b16 %v187
    %v362 = vunpack.c.l.b16 %v188
    %v363 = vunpack.c.h.b16 %v188
    %v364 = vunpack.c.l.b16 %v189
    %v365 = vunpack.c.h.b16 %v189
    %v366 = vunpack.c.l.b16 %v190
    %v367 = vunpack.c.h.b16 %v190
    %v368 = vunpack.c.l.b16 %v191
    %v369 = vunpack.c.h.b16 %v191
    %v370 = vunpack.c.l.b16 %v192
    %v371 = vunpack.c.h.b16 %v192
    %v372 = vunpack.c.l.b16 %v193
    %v373 = vunpack.c.h.b16 %v193
    %v374 = vunpack.c.l.b16 %v194
    %v375 = vunpack.c.h.b16 %v194
    %v376 = vunpack.c.l.b16 %v195
    %v377 = vunpack.c.h.b16 %v195
    %v378 = vunpack.c.l.b16 %v196
    %v379 = vunpack.c.h.b16 %v196
    %v380 = vunpack.c.l.b16 %v197
    %v381 = vunpack.c.h.b16 %v197
    %v382 = vunpack.c.l.b16 %v198
    %v383 = vunpack.c.h.b16 %v198
    %v384 = vunpack.c.l.b16 %v199
    %v385 = vunpack.c.h.b16 %v199
    %v386 = vunpack.c.l.b16 %v200
    %v387 = vunpack.c.h.b16 %v200
    %v388 = vunpack.c.l.b16 %v201
    %v389 = vunpack.c.h.b16 %v201
    %v390 = vunpack.c.l.b16 %v202
    %v391 = vunpack.c.h.b16 %v202
    %v392 = vunpack.c.l.b16 %v203
    %v393 = vunpack.c.h.b16 %v203
    %v394 = vunpack.c.l.b16 %v204
    %v395 = vunpack.c.h.b16 %v204
    %v396 = vunpack.c.l.b16 %v205
    %v397 = vunpack.c.h.b16 %v205
    %v398 = vpack.c.b16 %v272, %v270
    %v399 = vpack.c.b16 %v273, %v271
    %v400 = vpack.c.b16 %v276, %v274
    %v401 = vpack.c.b16 %v277, %v275
    %v402 = vpack.c.b16 %v280, %v278
    %v403 = vpack.c.b16 %v281, %v279
    %v404 = vpack.c.b16 %v284, %v282
    %v405 = vpack.c.b16 %v285, %v283
    %v406 = vpack.c.b16 %v288, %v286
    %v407 = vpack.c.b16 %v289, %v287
    %v408 = vpack.c.b16 %v292, %v290
    %v409 = vpack.c.b16 %v293, %v291
    %v410 = vpack.c.b16 %v296, %v294
    %v411 = vpack.c.b16 %v297, %v295
    %v412 = vpack.c.b16 %v300, %v298
    %v413 = vpack.c.b16 %v301, %v299
    %v414 = vpack.c.b16 %v304, %v302
    %v415 = vpack.c.b16 %v305, %v303
    %v416 = vpack.c.b16 %v308, %v306
    %v417 = vpack.c.b16 %v309, %v307
    %v418 = vpack.c.b16 %v312, %v310
    %v419 = vpack.c.b16 %v313, %v311
    %v420 = vpack.c.b16 %v316, %v314
    %v421 = vpack.c.b16 %v317, %v315
    %v422 = vpack.c.b16 %v320, %v318
    %v423 = vpack.c.b16 %v321, %v319
    %v424 = vpack.c.b16 %v324, %v322
    %v425 = vpack.c.b16 %v325, %v323
    %v426 = vpack.c.b16 %v328, %v326
    %v427 = vpack.c.b16 %v329, %v327
    %v428 = vpack.c.b16 %v332, %v330
    %v429 = vpack.c.b16 %v333, %v331
    %v430 = vpack.c.b16 %v336, %v334
    %v431 = vpack.c.b16 %v337, %v335
    %v432 = vpack.c.b16 %v340, %v338
    %v433 = vpack.c.b16 %v341, %v339
    %v434 = vpack.c.b16 %v344, %v342
    %v435 = vpack.c.b16 %v345, %v343
    %v436 = vpack.c.b16 %v348, %v346
    %v437 = vpack.c.b16 %v349, %v347
    %v438 = vpack.c.b16 %v352, %v350
    %v439 = vpack.c.b16 %v353, %v351
    %v440 = vpack.c.b16 %v356, %v354
    %v441 = vpack.c.b16 %v357, %v355
    %v442 = vpack.c.b16 %v360, %v358
    %v443 = vpack.c.b16 %v361, %v359
    %v444 = vpack.c.b16 %v364, %v362
    %v445 = vpack.c.b16 %v365, %v363
    %v446 = vpack.c.b16 %v368, %v366
    %v447 = vpack.c.b16 %v369, %v367
    %v448 = vpack.c.b16 %v372, %v370
    %v449 = vpack.c.b16 %v373, %v371
    %v450 = vpack.c.b16 %v376, %v374
    %v451 = vpack.c.b16 %v377, %v375
    %v452 = vpack.c.b16 %v380, %v378
    %v453 = vpack.c.b16 %v381, %v379
    %v454 = vpack.c.b16 %v384, %v382
    %v455 = vpack.c.b16 %v385, %v383
    %v456 = vpack.c.b16 %v388, %v386
    %v457 = vpack.c.b16 %v389, %v387
    %v458 = vpack.c.b16 %v392, %v390
    %v459 = vpack.c.b16 %v393, %v391
    %v460 = vpack.c.b16 %v396, %v394
    %v461 = vpack.c.b16 %v397, %v395
    %526 = vmatprep.subr.bf16.mxu0 %v399
    %527 = vmatpush1.bf16.msra.mxu0 %v398
    %528 = vmatprep.subr.bf16.mxu0 %v401
    %529 = vmatpush1.bf16.msra.mxu0 %v400
    %530 = vmatprep.subr.bf16.mxu0 %v403
    %531 = vmatpush1.bf16.msra.mxu0 %v402
    %532 = vmatprep.subr.bf16.mxu0 %v405
    %533 = vmatpush1.bf16.msra.mxu0 %v404
    %534 = vmatprep.subr.bf16.mxu0 %v407
    %535 = vmatpush1.bf16.msra.mxu0 %v406
    %536 = vmatprep.subr.bf16.mxu0 %v409
    %537 = vmatpush1.bf16.msra.mxu0 %v408
    %538 = vmatprep.subr.bf16.mxu0 %v411
    %539 = vmatpush1.bf16.msra.mxu0 %v410
    %540 = vmatprep.subr.bf16.mxu0 %v413
    %541 = vmatpush1.bf16.msra.mxu0 %v412
    %542 = vmatprep.subr.bf16.mxu0 %v415
    %543 = vmatpush1.bf16.msra.mxu0 %v414
    %544 = vmatprep.subr.bf16.mxu0 %v417
    %545 = vmatpush1.bf16.msra.mxu0 %v416
    %546 = vmatprep.subr.bf16.mxu0 %v419
    %547 = vmatpush1.bf16.msra.mxu0 %v418
    %548 = vmatprep.subr.bf16.mxu0 %v421
    %549 = vmatpush1.bf16.msra.mxu0 %v420
    %550 = vmatprep.subr.bf16.mxu0 %v423
    %551 = vmatpush1.bf16.msra.mxu0 %v422
    %552 = vmatprep.subr.bf16.mxu0 %v425
    %553 = vmatpush1.bf16.msra.mxu0 %v424
    %554 = vmatprep.subr.bf16.mxu0 %v427
    %555 = vmatpush1.bf16.msra.mxu0 %v426
    %556 = vmatprep.subr.bf16.mxu0 %v429
    %557 = vmatpush1.bf16.msra.mxu0 %v428
    %558 = vmatprep.mubr.bf16.mxu0 %v125
    %559 = vmatmul.mubr.bf16.gmra.mrb[0].mxu0 %v124
    %v560 = vpop.f32.mrb[0].mxu0
    %v561 = vadd.f32 0.0, %v560
    %v562 = vpop.f32.mrb[0].mxu0
    %v563 = vadd.f32 0.0, %v562
    %v564 = vpop.f32.mrb[0].mxu0
    %v565 = vpop.f32.mrb[0].mxu0
    %566 = vdwg.mxu0
    %567 = vmatprep.subr.bf16.mxu0 %v431
    %568 = vmatpush1.bf16.msra.mxu0 %v430
    %569 = vmatprep.subr.bf16.mxu0 %v433
    %570 = vmatpush1.bf16.msra.mxu0 %v432
    %571 = vmatprep.subr.bf16.mxu0 %v435
    %572 = vmatpush1.bf16.msra.mxu0 %v434
    %573 = vmatprep.subr.bf16.mxu0 %v437
    %574 = vmatpush1.bf16.msra.mxu0 %v436
    %575 = vmatprep.subr.bf16.mxu0 %v439
    %576 = vmatpush1.bf16.msra.mxu0 %v438
    %577 = vmatprep.subr.bf16.mxu0 %v441
    %578 = vmatpush1.bf16.msra.mxu0 %v440
    %579 = vmatprep.subr.bf16.mxu0 %v443
    %580 = vmatpush1.bf16.msra.mxu0 %v442
    %581 = vmatprep.subr.bf16.mxu0 %v445
    %582 = vmatpush1.bf16.msra.mxu0 %v444
    %583 = vmatprep.subr.bf16.mxu0 %v447
    %584 = vmatpush1.bf16.msra.mxu0 %v446
    %585 = vmatprep.subr.bf16.mxu0 %v449
    %586 = vmatpush1.bf16.msra.mxu0 %v448
    %587 = vmatprep.subr.bf16.mxu0 %v451
    %588 = vmatpush1.bf16.msra.mxu0 %v450
    %589 = vmatprep.subr.bf16.mxu0 %v453
    %590 = vmatpush1.bf16.msra.mxu0 %v452
    %591 = vmatprep.subr.bf16.mxu0 %v455
    %592 = vmatpush1.bf16.msra.mxu0 %v454
    %593 = vmatprep.subr.bf16.mxu0 %v457
    %594 = vmatpush1.bf16.msra.mxu0 %v456
    %595 = vmatprep.subr.bf16.mxu0 %v459
    %596 = vmatpush1.bf16.msra.mxu0 %v458
    %597 = vmatprep.subr.bf16.mxu0 %v461
    %598 = vmatpush1.bf16.msra.mxu0 %v460
    %599 = vmatprep.mubr.bf16.mxu0 %v139
    %600 = vmatmul.mubr.bf16.gmra.mrb[0].mxu0 %v138
    %v601 = vpop.f32.mrb[0].mxu0
    %v602 = vadd.f32 %v561, %v601
    %v603 = vpop.f32.mrb[0].mxu0
    %v604 = vadd.f32 %v563, %v603
    %v605 = vpop.f32.mrb[0].mxu0
    %v606 = vpop.f32.mrb[0].mxu0
    %607 = vdwg.mxu0
    %v608 = vxor.u32 %v602, 2147483648
    %v609 = vxor.u32 %v604, 2147483648
    %v610 = vmul.f32 %v608, 1.442695
    %v611 = vpow.pop %v610
    %v612 = vmul.f32 %v609, 1.442695
    %v613 = vpow.pop %v612
    %v614 = vadd.f32 %v611, 1.0
    %v615 = vadd.f32 %v613, 1.0
    %v616 = vrcp.pop %v614
    %v617 = vmul.f32 1.0, %v616
    %v618 = vrcp.pop %v615
    %v619 = vmul.f32 1.0, %v618
    %v622 = vcombine.low %v617, %v619
    %v624 = vunpack.c.l.s4 1983009808
    %v625 = vunpack.c.0.s8 %v624
    %v626 = vlaneseq
    %v627 = vshrl.u32 %v626, 7
    %v628 = vsub.s32 %v625, %v627
    %v629 = vrot.slane %v622, %v628
    %631 = vst [vmem:[#allocation7] sm:$0xf] %v629
    // Predicated region
    $region18: #{tpu_custom_call.1} parent=1 // pred_check
      _
    $region19: #{tpu_custom_call.1} parent=1 // pred_check_branch
      %633 = sbr.rel (0) target = $region21
    $region20: #{tpu_custom_call.1} parent=1 // pred_region
      %s635 = ssub.s32 64, 64
      %636 = vsyncadd [#allocation4], %s635
      %s638 = sshll.u32 [#allocation7], 4
      %s639 = int_to_ptr.vmem [resolvable:$true] %s638
      %641 = dma.vmem_to_hbm [thread:$0]  %s639, 64, %s2, [#allocation4]
    $region21: #{tpu_custom_call.1} parent=1 // pred_fallthru
      _
    // Predicated region
    $region22: #{tpu_custom_call.1} parent=1 // pred_check
      _
    $region23: #{tpu_custom_call.1} parent=1 // pred_check_branch
      %643 = sbr.rel (0) target = $region25
    $region24: #{tpu_custom_call.1} parent=1 // pred_region
      %644 = dma.done [#allocation4], 64
    $region25: #{tpu_custom_call.1} parent=1 // pred_fallthru
      _
    %645 = vsyncpa [#allocation3], 1
    %646 = vsyncpa [#allocation6], 1
    %647 = vsyncpa [#allocation4], 1

</llo_original>
